<compile_context>
chip_gen: v7x
topology: tpu7x:2x2x1
jax: 0.10.0
libtpu: 0.0.40
codegen_flags: <defaults>
</compile_context>

<pallas_src>
import jax
import jax.numpy as jnp
from jax import lax
from jax.experimental import pallas as pl
from jax.experimental.pallas import tpu as pltpu

_LANE = 128
_MiB = 1024 * 1024


# --------------------------------------------------------------------------
# Tiling / budget helpers (all trace-time Python).
# --------------------------------------------------------------------------
def _derive_vmem_limit():
    """Scoped VMEM limit derived from the chip (3/4 of physical, capped)."""
    cap = None
    try:
        cap = int(pltpu.get_tpu_info().vmem_capacity_bytes)
    except Exception:
        cap = None
    if not cap or cap <= 0:
        cap = 64 * _MiB  # conservative (v7x per-TC VMEM)
    return min((cap * 3) // 4, 96 * _MiB)


def _largest_multiple_divisor(n, step, cap):
    """Largest d with d % step == 0, n % d == 0 and d <= cap (None if none)."""
    best = None
    d = step
    top = min(n, cap)
    while d <= top:
        if n % d == 0:
            best = d
        d += step
    return best


def _pick_c_block(C, cap, prefer_split):
    if C % 8 != 0:
        return C  # must take the full (untiled) channel dim
    eff_cap = cap
    if prefer_split and C >= 16:
        eff_cap = min(cap, C // 2)  # keep >= 2 channel tiles (megacore)
    d = _largest_multiple_divisor(C, 8, max(8, eff_cap))
    return d if d is not None else C


def _pick_hw_block(hw, c_block, target_bytes):
    if hw % _LANE != 0:
        return hw  # full (untiled) last dim is always legal
    cap_lanes = max(_LANE, (target_bytes // (c_block * 4)) // _LANE * _LANE)
    d = _largest_multiple_divisor(hw, _LANE, cap_lanes)
    return d if d is not None else hw


def _pick_n_block(N, c_block, hw_block, target_bytes):
    per_n = c_block * hw_block * 4
    best = 1
    for d in range(1, N + 1):
        if N % d == 0 and d * per_n <= target_bytes:
            best = d
    return best


# --------------------------------------------------------------------------
# Pass 1: per-channel stats (+ fused affine fold & running-stats update).
# --------------------------------------------------------------------------
def _make_stats_kernel(n_block, c_block, hw_block, nhw, eps, momentum):
    n_chunks = hw_block // _LANE
    rem = hw_block % _LANE

    def kernel(x_ref, gamma_ref, beta_ref, rm_ref, rv_ref,
               scale_ref, shift_ref, new_rm_ref, new_rv_ref,
               sum_acc, sq_acc, tsum_acc, tsq_acc):
        ni = pl.program_id(1)
        ti = pl.program_id(2)

        @pl.when((ni == 0) & (ti == 0))
        def _init():
            sum_acc[...] = jnp.zeros_like(sum_acc)
            sq_acc[...] = jnp.zeros_like(sq_acc)
            tsum_acc[...] = jnp.zeros_like(tsum_acc)
            tsq_acc[...] = jnp.zeros_like(tsq_acc)

        # Main 128-lane chunks: per-chunk ref loads (no full-tile f32 copy);
        # accumulators carried in vregs within the step (c_block <= 64 keeps
        # the pair <= 16 vregs), committed to VMEM scratch once per step.
        if n_chunks > 0:
            s = sum_acc[...]
            q = sq_acc[...]

            def accum_n(n, s, q):
                if n_chunks <= 32:
                    for i in range(n_chunks):
                        sl = x_ref[n, :, pl.ds(i * _LANE, _LANE)].astype(jnp.float32)
                        s = s + sl
                        q = q + sl * sl
                    return s, q

                def body(i, carry):
                    s_c, q_c = carry
                    off = pl.multiple_of(i * _LANE, _LANE)
                    sl = x_ref[n, :, pl.ds(off, _LANE)].astype(jnp.float32)
                    return s_c + sl, q_c + sl * sl

                return lax.fori_loop(0, n_chunks, body, (s, q), unroll=8)

            if n_block <= 8:
                for n in range(n_block):
                    s, q = accum_n(n, s, q)
            else:
                s, q = lax.fori_loop(0, n_block,
                                     lambda n, c: accum_n(n, *c), (s, q))
            sum_acc[...] = s
            sq_acc[...] = q

        # Tail lanes (HW % 128 != 0): separate narrow accumulators,
        # no per-step concatenate.
        if rem > 0:
            ts = tsum_acc[...]
            tq = tsq_acc[...]

            def tail_n(n, ts, tq):
                tail = x_ref[n, :, pl.ds(n_chunks * _LANE, rem)].astype(jnp.float32)
                return ts + tail, tq + tail * tail

            if n_block <= 8:
                for n in range(n_block):
                    ts, tq = tail_n(n, ts, tq)
            else:
                ts, tq = lax.fori_loop(0, n_block,
                                       lambda n, c: tail_n(n, *c), (ts, tq))
            tsum_acc[...] = ts
            tsq_acc[...] = tq

        @pl.when((ni == pl.num_programs(1) - 1) & (ti == pl.num_programs(2) - 1))
        def _finalize():
            inv_n = 1.0 / float(nhw)
            total = (jnp.sum(sum_acc[...], axis=-1, keepdims=True)
                     + jnp.sum(tsum_acc[...], axis=-1, keepdims=True))
            total_sq = (jnp.sum(sq_acc[...], axis=-1, keepdims=True)
                        + jnp.sum(tsq_acc[...], axis=-1, keepdims=True))
            mean = total * inv_n
            # E[x^2] - mean^2 in f32 (clamped at 0); OK for BN-scale data.
            var = jnp.maximum(total_sq * inv_n - mean * mean, 0.0)
            inv_std = lax.rsqrt(var + eps)
            scale = gamma_ref[...] * inv_std
            shift = beta_ref[...] - mean * scale
            scale_ref[...] = scale
            shift_ref[...] = shift
            # Running-stats momentum update fused in-kernel (biased variance,
            # matching the reference module's forward).
            new_rm_ref[...] = (1.0 - momentum) * rm_ref[...] + momentum * mean
            new_rv_ref[...] = (1.0 - momentum) * rv_ref[...] + momentum * var

    return kernel


# --------------------------------------------------------------------------
# Pass 2: normalize (y = x * scale + shift), fully streaming.
# --------------------------------------------------------------------------
def _normalize_kernel(x_ref, scale_ref, shift_ref, y_ref):
    x = x_ref[...].astype(jnp.float32)            # (n_block, c_block, hw_block)
    y = x * scale_ref[...] + shift_ref[...]       # (c_block, 1) broadcasts
    y_ref[...] = y.astype(y_ref.dtype)


# --------------------------------------------------------------------------
# Wrapper.
# --------------------------------------------------------------------------
def batch_norm_2d(x, gamma, beta, running_mean, running_var,
                  eps=1e-5, momentum=0.1):
    """Training-mode BatchNorm2d forward (matches the reference nn.Module).

    x: (N, C, H, W); gamma/beta/running_mean/running_var: (C,)
    Returns (y, new_running_mean, new_running_var); y has shape (N, C, H, W).
    """
    N, C, H, W = x.shape
    hw = H * W
    nhw = N * hw

    vmem_limit = _derive_vmem_limit()
    block_target = min(vmem_limit // 6, 8 * _MiB)   # ~8 MiB f32 x blocks

    # ---- pass 1 tiling (stats): small channel tile (vreg-friendly
    # accumulators), prefer >= 2 channel tiles for megacore sharding.
    c1 = _pick_c_block(C, cap=64, prefer_split=True)
    h1 = _pick_hw_block(hw, c1, block_target)
    n1 = _pick_n_block(N, c1, h1, block_target)
    grid1 = (C // c1, N // n1, hw // h1)
    rem1 = h1 % _LANE

    # ---- pass 2 tiling (normalize): pure streaming, larger channel tiles OK.
    c2 = _pick_c_block(C, cap=256, prefer_split=False)
    h2 = _pick_hw_block(hw, c2, block_target)
    n2 = _pick_n_block(N, c2, h2, block_target)
    grid2 = (C // c2, N // n2, hw // h2)

    # Free views only -- no materialized HBM transpose.
    x3 = x.reshape(N, C, hw)
    gamma_c = gamma.reshape(C, 1).astype(jnp.float32)
    beta_c = beta.reshape(C, 1).astype(jnp.float32)
    rm_c = running_mean.reshape(C, 1).astype(jnp.float32)
    rv_c = running_var.reshape(C, 1).astype(jnp.float32)

    x1_spec = pl.BlockSpec((n1, c1, h1), lambda ci, ni, ti: (ni, ci, ti))
    p1_spec = pl.BlockSpec((c1, 1), lambda ci, ni, ti: (ci, 0))

    scale, shift, new_rm, new_rv = pl.pallas_call(
        _make_stats_kernel(n1, c1, h1, nhw, eps, momentum),
        grid=grid1,
        in_specs=[x1_spec, p1_spec, p1_spec, p1_spec, p1_spec],
        out_specs=(p1_spec, p1_spec, p1_spec, p1_spec),
        out_shape=tuple(jax.ShapeDtypeStruct((C, 1), jnp.float32)
                        for _ in range(4)),
        scratch_shapes=[pltpu.VMEM((c1, _LANE), jnp.float32),
                        pltpu.VMEM((c1, _LANE), jnp.float32),
                        pltpu.VMEM((c1, max(rem1, 1)), jnp.float32),
                        pltpu.VMEM((c1, max(rem1, 1)), jnp.float32)],
        compiler_params=pltpu.CompilerParams(
            dimension_semantics=("parallel", "arbitrary", "arbitrary"),
            vmem_limit_bytes=vmem_limit),
    )(x3, gamma_c, beta_c, rm_c, rv_c)

    x2_spec = pl.BlockSpec((n2, c2, h2), lambda ci, ni, ti: (ni, ci, ti))
    p2_spec = pl.BlockSpec((c2, 1), lambda ci, ni, ti: (ci, 0))

    y3 = pl.pallas_call(
        _normalize_kernel,
        grid=grid2,
        in_specs=[x2_spec, p2_spec, p2_spec],
        out_specs=x2_spec,
        out_shape=jax.ShapeDtypeStruct((N, C, hw), x.dtype),
        compiler_params=pltpu.CompilerParams(
            dimension_semantics=("parallel", "parallel", "parallel"),
            vmem_limit_bytes=vmem_limit),
    )(x3, scale, shift)

    y = y3.reshape(N, C, H, W)
    return y, new_rm.reshape(C), new_rv.reshape(C)


if __name__ == "__main__":
    key = jax.random.PRNGKey(0)
    N, C, H, W = 2, 4, 16, 16
    x = jax.random.normal(key, (N, C, H, W), dtype=jnp.float32)

    # deterministic parameter init, same as the module's __init__
    gamma = jnp.ones((C,), dtype=jnp.float32)
    beta = jnp.zeros((C,), dtype=jnp.float32)
    running_mean = jnp.zeros((C,), dtype=jnp.float32)
    running_var = jnp.ones((C,), dtype=jnp.float32)

    y, rm, rv = jax.jit(batch_norm_2d)(x, gamma, beta, running_mean, running_var)
    jax.block_until_ready((y, rm, rv))

    # Pure-JAX reference (matches the PyTorch module's training forward).
    mean_ref = x.mean(axis=(0, 2, 3), keepdims=True)
    var_ref = x.var(axis=(0, 2, 3), keepdims=True)           # biased
    y_ref = (x - mean_ref) / jnp.sqrt(var_ref + 1e-5)
    y_ref = gamma.reshape(1, C, 1, 1) * y_ref + beta.reshape(1, C, 1, 1)
    rm_ref = 0.9 * running_mean + 0.1 * mean_ref.reshape(C)
    rv_ref = 0.9 * running_var + 0.1 * var_ref.reshape(C)

    assert jnp.allclose(y, y_ref, atol=1e-4, rtol=1e-4), "y mismatch"
    assert jnp.allclose(rm, rm_ref, atol=1e-5, rtol=1e-5), "running_mean mismatch"
    assert jnp.allclose(rv, rv_ref, atol=1e-5, rtol=1e-5), "running_var mismatch"

    print("KERNEL_OK")
</pallas_src>

<mosaic_0001>
module attributes {stable_mosaic.version = 11 : i64} {
  func.func @_normalize_kernel(%arg0: i32, %arg1: i32, %arg2: i32, %arg3: memref<2x4x256xf32, #tpu.memory_space<vmem>>, %arg4: memref<4x1xf32, #tpu.memory_space<vmem>>, %arg5: memref<4x1xf32, #tpu.memory_space<vmem>>, %arg6: memref<2x4x256xf32, #tpu.memory_space<vmem>>) attributes {dimension_semantics = [#tpu.dimension_semantics<parallel>, #tpu.dimension_semantics<parallel>, #tpu.dimension_semantics<parallel>], iteration_bounds = array<i64: 1, 1, 1>, scalar_prefetch = 0 : i64, scratch_operands = 0 : i64, tpu.core_type = #tpu.core_type<tc>, window_params = [{transform_indices = @transform_0, window_bounds = array<i64: 2, 4, 256>}, {transform_indices = @transform_1, window_bounds = array<i64: 4, 1>}, {transform_indices = @transform_2, window_bounds = array<i64: 4, 1>}, {transform_indices = @transform_3, window_bounds = array<i64: 2, 4, 256>}]} {
    %c0 = arith.constant 0 : index
    %c0_0 = arith.constant 0 : index
    %c0_1 = arith.constant 0 : index
    %0 = vector.load %arg3[%c0, %c0_0, %c0_1] : memref<2x4x256xf32, #tpu.memory_space<vmem>>, vector<2x4x256xf32>
    %c0_2 = arith.constant 0 : index
    %c0_3 = arith.constant 0 : index
    %1 = vector.load %arg4[%c0_2, %c0_3] : memref<4x1xf32, #tpu.memory_space<vmem>>, vector<4x1xf32>
    %2 = vector.shape_cast %1 : vector<4x1xf32> to vector<1x4x1xf32>
    %3 = vector.broadcast %2 : vector<1x4x1xf32> to vector<2x4x256xf32>
    %4 = arith.mulf %0, %3 : vector<2x4x256xf32>
    %c0_4 = arith.constant 0 : index
    %c0_5 = arith.constant 0 : index
    %5 = vector.load %arg5[%c0_4, %c0_5] : memref<4x1xf32, #tpu.memory_space<vmem>>, vector<4x1xf32>
    %6 = vector.shape_cast %5 : vector<4x1xf32> to vector<1x4x1xf32>
    %7 = vector.broadcast %6 : vector<1x4x1xf32> to vector<2x4x256xf32>
    %8 = arith.addf %4, %7 : vector<2x4x256xf32>
    %c0_6 = arith.constant 0 : index
    %c0_7 = arith.constant 0 : index
    %c0_8 = arith.constant 0 : index
    %9 = vector.load %arg6[%c0_6, %c0_7, %c0_8] : memref<2x4x256xf32, #tpu.memory_space<vmem>>, vector<2x4x256xf32>
    tpu.vector_store %arg6[%c0_6, %c0_7, %c0_8], %8 {strides = array<i32>} : memref<2x4x256xf32, #tpu.memory_space<vmem>>, vector<2x4x256xf32>,
    return
  }
  func.func @transform_0(%arg0: i32, %arg1: i32, %arg2: i32) -> (i32, i32, i32) {
    %c0_i32 = arith.constant 0 : i32
    return %arg1, %arg0, %arg2 : i32, i32, i32
  }
  func.func @transform_1(%arg0: i32, %arg1: i32, %arg2: i32) -> (i32, i32) {
    %c0_i32 = arith.constant 0 : i32
    %c0_i32_0 = arith.constant 0 : i32
    return %arg0, %c0_i32 : i32, i32
  }
  func.func @transform_2(%arg0: i32, %arg1: i32, %arg2: i32) -> (i32, i32) {
    %c0_i32 = arith.constant 0 : i32
    %c0_i32_0 = arith.constant 0 : i32
    return %arg0, %c0_i32 : i32, i32
  }
  func.func @transform_3(%arg0: i32, %arg1: i32, %arg2: i32) -> (i32, i32, i32) {
    %c0_i32 = arith.constant 0 : i32
    return %arg1, %arg0, %arg2 : i32, i32, i32
  }
}

module attributes {stable_mosaic.version = 11 : i64} {
  func.func @kernel(%arg0: i32, %arg1: i32, %arg2: i32, %arg3: memref<2x4x256xf32, #tpu.memory_space<vmem>>, %arg4: memref<4x1xf32, #tpu.memory_space<vmem>>, %arg5: memref<4x1xf32, #tpu.memory_space<vmem>>, %arg6: memref<4x1xf32, #tpu.memory_space<vmem>>, %arg7: memref<4x1xf32, #tpu.memory_space<vmem>>, %arg8: memref<4x1xf32, #tpu.memory_space<vmem>>, %arg9: memref<4x1xf32, #tpu.memory_space<vmem>>, %arg10: memref<4x1xf32, #tpu.memory_space<vmem>>, %arg11: memref<4x1xf32, #tpu.memory_space<vmem>>, %arg12: memref<4x128xf32, #tpu.memory_space<vmem>>, %arg13: memref<4x128xf32, #tpu.memory_space<vmem>>, %arg14: memref<4x1xf32, #tpu.memory_space<vmem>>, %arg15: memref<4x1xf32, #tpu.memory_space<vmem>>) attributes {dimension_semantics = [#tpu.dimension_semantics<parallel>, #tpu.dimension_semantics<arbitrary>, #tpu.dimension_semantics<arbitrary>], iteration_bounds = array<i64: 1, 1, 1>, scalar_prefetch = 0 : i64, scratch_operands = 4 : i64, tpu.core_type = #tpu.core_type<tc>, window_params = [{transform_indices = @transform_0, window_bounds = array<i64: 2, 4, 256>}, {transform_indices = @transform_1, window_bounds = array<i64: 4, 1>}, {transform_indices = @transform_2, window_bounds = array<i64: 4, 1>}, {transform_indices = @transform_3, window_bounds = array<i64: 4, 1>}, {transform_indices = @transform_4, window_bounds = array<i64: 4, 1>}, {transform_indices = @transform_5, window_bounds = array<i64: 4, 1>}, {transform_indices = @transform_6, window_bounds = array<i64: 4, 1>}, {transform_indices = @transform_7, window_bounds = array<i64: 4, 1>}, {transform_indices = @transform_8, window_bounds = array<i64: 4, 1>}]} {
    %c0_i32 = arith.constant 0 : i32
    %0 = arith.cmpi eq, %arg1, %c0_i32 : i32
    %c0_i32_0 = arith.constant 0 : i32
    %1 = arith.cmpi eq, %arg2, %c0_i32_0 : i32
    %2 = arith.andi %0, %1 : i1
    %3 = arith.extui %2 : i1 to i32
    %c0_i32_1 = arith.constant 0 : i32
    %4 = arith.cmpi ne, %3, %c0_i32_1 : i32
    scf.if %4 {
      %cst = arith.constant 0.000000e+00 : f32
      %34 = vector.broadcast %cst : f32 to vector<4x128xf32>
      %c0_22 = arith.constant 0 : index
      %c0_23 = arith.constant 0 : index
      %35 = vector.load %arg12[%c0_22, %c0_23] : memref<4x128xf32, #tpu.memory_space<vmem>>, vector<4x128xf32>
      tpu.vector_store %arg12[%c0_22, %c0_23], %34 {strides = array<i32>} : memref<4x128xf32, #tpu.memory_space<vmem>>, vector<4x128xf32>,
      %cst_24 = arith.constant 0.000000e+00 : f32
      %36 = vector.broadcast %cst_24 : f32 to vector<4x128xf32>
      %c0_25 = arith.constant 0 : index
      %c0_26 = arith.constant 0 : index
      %37 = vector.load %arg13[%c0_25, %c0_26] : memref<4x128xf32, #tpu.memory_space<vmem>>, vector<4x128xf32>
      tpu.vector_store %arg13[%c0_25, %c0_26], %36 {strides = array<i32>} : memref<4x128xf32, #tpu.memory_space<vmem>>, vector<4x128xf32>,
      %cst_27 = arith.constant 0.000000e+00 : f32
      %38 = vector.broadcast %cst_27 : f32 to vector<4x1xf32>
      %c0_28 = arith.constant 0 : index
      %c0_29 = arith.constant 0 : index
      %39 = vector.load %arg14[%c0_28, %c0_29] : memref<4x1xf32, #tpu.memory_space<vmem>>, vector<4x1xf32>
      tpu.vector_store %arg14[%c0_28, %c0_29], %38 {strides = array<i32>} : memref<4x1xf32, #tpu.memory_space<vmem>>, vector<4x1xf32>,
      %cst_30 = arith.constant 0.000000e+00 : f32
      %40 = vector.broadcast %cst_30 : f32 to vector<4x1xf32>
      %c0_31 = arith.constant 0 : index
      %c0_32 = arith.constant 0 : index
      %41 = vector.load %arg15[%c0_31, %c0_32] : memref<4x1xf32, #tpu.memory_space<vmem>>, vector<4x1xf32>
      tpu.vector_store %arg15[%c0_31, %c0_32], %40 {strides = array<i32>} : memref<4x1xf32, #tpu.memory_space<vmem>>, vector<4x1xf32>,
    } else {
    }
    %c0 = arith.constant 0 : index
    %c0_2 = arith.constant 0 : index
    %5 = vector.load %arg12[%c0, %c0_2] : memref<4x128xf32, #tpu.memory_space<vmem>>, vector<4x128xf32>
    %c0_3 = arith.constant 0 : index
    %c0_4 = arith.constant 0 : index
    %6 = vector.load %arg13[%c0_3, %c0_4] : memref<4x128xf32, #tpu.memory_space<vmem>>, vector<4x128xf32>
    %c0_5 = arith.constant 0 : index
    %c0_6 = arith.constant 0 : index
    %c0_7 = arith.constant 0 : index
    %7 = vector.load %arg3[%c0_5, %c0_6, %c0_7] : memref<2x4x256xf32, #tpu.memory_space<vmem>>, vector<1x4x128xf32>
    %8 = vector.shape_cast %7 : vector<1x4x128xf32> to vector<4x128xf32>
    %9 = arith.addf %5, %8 : vector<4x128xf32>
    %10 = arith.mulf %8, %8 : vector<4x128xf32>
    %11 = arith.addf %6, %10 : vector<4x128xf32>
    %c0_8 = arith.constant 0 : index
    %c0_9 = arith.constant 0 : index
    %c128 = arith.constant 128 : index
    %12 = vector.load %arg3[%c0_8, %c0_9, %c128] : memref<2x4x256xf32, #tpu.memory_space<vmem>>, vector<1x4x128xf32>
    %13 = vector.shape_cast %12 : vector<1x4x128xf32> to vector<4x128xf32>
    %14 = arith.addf %9, %13 : vector<4x128xf32>
    %15 = arith.mulf %13, %13 : vector<4x128xf32>
    %16 = arith.addf %11, %15 : vector<4x128xf32>
    %c1 = arith.constant 1 : index
    %c0_10 = arith.constant 0 : index
    %c0_11 = arith.constant 0 : index
    %17 = vector.load %arg3[%c1, %c0_10, %c0_11] : memref<2x4x256xf32, #tpu.memory_space<vmem>>, vector<1x4x128xf32>
    %18 = vector.shape_cast %17 : vector<1x4x128xf32> to vector<4x128xf32>
    %19 = arith.addf %14, %18 : vector<4x128xf32>
    %20 = arith.mulf %18, %18 : vector<4x128xf32>
    %21 = arith.addf %16, %20 : vector<4x128xf32>
    %c1_12 = arith.constant 1 : index
    %c0_13 = arith.constant 0 : index
    %c128_14 = arith.constant 128 : index
    %22 = vector.load %arg3[%c1_12, %c0_13, %c128_14] : memref<2x4x256xf32, #tpu.memory_space<vmem>>, vector<1x4x128xf32>
    %23 = vector.shape_cast %22 : vector<1x4x128xf32> to vector<4x128xf32>
    %24 = arith.addf %19, %23 : vector<4x128xf32>
    %25 = arith.mulf %23, %23 : vector<4x128xf32>
    %26 = arith.addf %21, %25 : vector<4x128xf32>
    %c0_15 = arith.constant 0 : index
    %c0_16 = arith.constant 0 : index
    %27 = vector.load %arg12[%c0_15, %c0_16] : memref<4x128xf32, #tpu.memory_space<vmem>>, vector<4x128xf32>
    tpu.vector_store %arg12[%c0_15, %c0_16], %24 {strides = array<i32>} : memref<4x128xf32, #tpu.memory_space<vmem>>, vector<4x128xf32>,
    %c0_17 = arith.constant 0 : index
    %c0_18 = arith.constant 0 : index
    %28 = vector.load %arg13[%c0_17, %c0_18] : memref<4x128xf32, #tpu.memory_space<vmem>>, vector<4x128xf32>
    tpu.vector_store %arg13[%c0_17, %c0_18], %26 {strides = array<i32>} : memref<4x128xf32, #tpu.memory_space<vmem>>, vector<4x128xf32>,
    %c0_i32_19 = arith.constant 0 : i32
    %29 = arith.cmpi eq, %arg1, %c0_i32_19 : i32
    %c0_i32_20 = arith.constant 0 : i32
    %30 = arith.cmpi eq, %arg2, %c0_i32_20 : i32
    %31 = arith.andi %29, %30 : i1
    %32 = arith.extui %31 : i1 to i32
    %c0_i32_21 = arith.constant 0 : i32
    %33 = arith.cmpi ne, %32, %c0_i32_21 : i32
    scf.if %33 {
      %c0_22 = arith.constant 0 : index
      %c0_23 = arith.constant 0 : index
      %34 = vector.load %arg12[%c0_22, %c0_23] : memref<4x128xf32, #tpu.memory_space<vmem>>, vector<4x128xf32>
      %cst = arith.constant dense<0.000000e+00> : vector<4xf32>
      %35 = vector.multi_reduction <add>, %34, %cst [1] : vector<4x128xf32> to vector<4xf32>
      %36 = vector.shape_cast %35 : vector<4xf32> to vector<4x1xf32>
      %c0_24 = arith.constant 0 : index
      %c0_25 = arith.constant 0 : index
      %37 = vector.load %arg14[%c0_24, %c0_25] : memref<4x1xf32, #tpu.memory_space<vmem>>, vector<4x1xf32>
      %cst_26 = arith.constant dense<0.000000e+00> : vector<4xf32>
      %38 = vector.multi_reduction <add>, %37, %cst_26 [1] : vector<4x1xf32> to vector<4xf32>
      %39 = vector.shape_cast %38 : vector<4xf32> to vector<4x1xf32>
      %40 = arith.addf %36, %39 : vector<4x1xf32>
      %c0_27 = arith.constant 0 : index
      %c0_28 = arith.constant 0 : index
      %41 = vector.load %arg13[%c0_27, %c0_28] : memref<4x128xf32, #tpu.memory_space<vmem>>, vector<4x128xf32>
      %cst_29 = arith.constant dense<0.000000e+00> : vector<4xf32>
      %42 = vector.multi_reduction <add>, %41, %cst_29 [1] : vector<4x128xf32> to vector<4xf32>
      %43 = vector.shape_cast %42 : vector<4xf32> to vector<4x1xf32>
      %c0_30 = arith.constant 0 : index
      %c0_31 = arith.constant 0 : index
      %44 = vector.load %arg15[%c0_30, %c0_31] : memref<4x1xf32, #tpu.memory_space<vmem>>, vector<4x1xf32>
      %cst_32 = arith.constant dense<0.000000e+00> : vector<4xf32>
      %45 = vector.multi_reduction <add>, %44, %cst_32 [1] : vector<4x1xf32> to vector<4xf32>
      %46 = vector.shape_cast %45 : vector<4xf32> to vector<4x1xf32>
      %47 = arith.addf %43, %46 : vector<4x1xf32>
      %cst_33 = arith.constant 0.001953125 : f32
      %48 = vector.broadcast %cst_33 : f32 to vector<4x1xf32>
      %49 = arith.mulf %40, %48 : vector<4x1xf32>
      %cst_34 = arith.constant 0.001953125 : f32
      %50 = vector.broadcast %cst_34 : f32 to vector<4x1xf32>
      %51 = arith.mulf %47, %50 : vector<4x1xf32>
      %52 = arith.mulf %49, %49 : vector<4x1xf32>
      %53 = arith.subf %51, %52 : vector<4x1xf32>
      %cst_35 = arith.constant 0.000000e+00 : f32
      %54 = vector.broadcast %cst_35 : f32 to vector<4x1xf32>
      %55 = arith.maximumf %53, %54 : vector<4x1xf32>
      %cst_36 = arith.constant 9.99999974E-6 : f32
      %56 = vector.broadcast %cst_36 : f32 to vector<4x1xf32>
      %57 = arith.addf %55, %56 : vector<4x1xf32>
      %58 = math.rsqrt %57 : vector<4x1xf32>
      %c0_37 = arith.constant 0 : index
      %c0_38 = arith.constant 0 : index
      %59 = vector.load %arg4[%c0_37, %c0_38] : memref<4x1xf32, #tpu.memory_space<vmem>>, vector<4x1xf32>
      %60 = arith.mulf %59, %58 : vector<4x1xf32>
      %c0_39 = arith.constant 0 : index
      %c0_40 = arith.constant 0 : index
      %61 = vector.load %arg5[%c0_39, %c0_40] : memref<4x1xf32, #tpu.memory_space<vmem>>, vector<4x1xf32>
      %62 = arith.mulf %49, %60 : vector<4x1xf32>
      %63 = arith.subf %61, %62 : vector<4x1xf32>
      %c0_41 = arith.constant 0 : index
      %c0_42 = arith.constant 0 : index
      %64 = vector.load %arg8[%c0_41, %c0_42] : memref<4x1xf32, #tpu.memory_space<vmem>>, vector<4x1xf32>
      tpu.vector_store %arg8[%c0_41, %c0_42], %60 {strides = array<i32>} : memref<4x1xf32, #tpu.memory_space<vmem>>, vector<4x1xf32>,
      %c0_43 = arith.constant 0 : index
      %c0_44 = arith.constant 0 : index
      %65 = vector.load %arg9[%c0_43, %c0_44] : memref<4x1xf32, #tpu.memory_space<vmem>>, vector<4x1xf32>
      tpu.vector_store %arg9[%c0_43, %c0_44], %63 {strides = array<i32>} : memref<4x1xf32, #tpu.memory_space<vmem>>, vector<4x1xf32>,
      %c0_45 = arith.constant 0 : index
      %c0_46 = arith.constant 0 : index
      %66 = vector.load %arg6[%c0_45, %c0_46] : memref<4x1xf32, #tpu.memory_space<vmem>>, vector<4x1xf32>
      %cst_47 = arith.constant 0.899999976 : f32
      %67 = vector.broadcast %cst_47 : f32 to vector<4x1xf32>
      %68 = arith.mulf %67, %66 : vector<4x1xf32>
      %cst_48 = arith.constant 1.000000e-01 : f32
      %69 = vector.broadcast %cst_48 : f32 to vector<4x1xf32>
      %70 = arith.mulf %69, %49 : vector<4x1xf32>
      %71 = arith.addf %68, %70 : vector<4x1xf32>
      %c0_49 = arith.constant 0 : index
      %c0_50 = arith.constant 0 : index
      %72 = vector.load %arg10[%c0_49, %c0_50] : memref<4x1xf32, #tpu.memory_space<vmem>>, vector<4x1xf32>
      tpu.vector_store %arg10[%c0_49, %c0_50], %71 {strides = array<i32>} : memref<4x1xf32, #tpu.memory_space<vmem>>, vector<4x1xf32>,
      %c0_51 = arith.constant 0 : index
      %c0_52 = arith.constant 0 : index
      %73 = vector.load %arg7[%c0_51, %c0_52] : memref<4x1xf32, #tpu.memory_space<vmem>>, vector<4x1xf32>
      %cst_53 = arith.constant 0.899999976 : f32
      %74 = vector.broadcast %cst_53 : f32 to vector<4x1xf32>
      %75 = arith.mulf %74, %73 : vector<4x1xf32>
      %cst_54 = arith.constant 1.000000e-01 : f32
      %76 = vector.broadcast %cst_54 : f32 to vector<4x1xf32>
      %77 = arith.mulf %76, %55 : vector<4x1xf32>
      %78 = arith.addf %75, %77 : vector<4x1xf32>
      %c0_55 = arith.constant 0 : index
      %c0_56 = arith.constant 0 : index
      %79 = vector.load %arg11[%c0_55, %c0_56] : memref<4x1xf32, #tpu.memory_space<vmem>>, vector<4x1xf32>
      tpu.vector_store %arg11[%c0_55, %c0_56], %78 {strides = array<i32>} : memref<4x1xf32, #tpu.memory_space<vmem>>, vector<4x1xf32>,
    } else {
    }
    return
  }
  func.func @transform_0(%arg0: i32, %arg1: i32, %arg2: i32) -> (i32, i32, i32) {
    %c0_i32 = arith.constant 0 : i32
    return %arg1, %arg0, %arg2 : i32, i32, i32
  }
  func.func @transform_1(%arg0: i32, %arg1: i32, %arg2: i32) -> (i32, i32) {
    %c0_i32 = arith.constant 0 : i32
    %c0_i32_0 = arith.constant 0 : i32
    return %arg0, %c0_i32 : i32, i32
  }
  func.func @transform_2(%arg0: i32, %arg1: i32, %arg2: i32) -> (i32, i32) {
    %c0_i32 = arith.constant 0 : i32
    %c0_i32_0 = arith.constant 0 : i32
    return %arg0, %c0_i32 : i32, i32
  }
  func.func @transform_3(%arg0: i32, %arg1: i32, %arg2: i32) -> (i32, i32) {
    %c0_i32 = arith.constant 0 : i32
    %c0_i32_0 = arith.constant 0 : i32
    return %arg0, %c0_i32 : i32, i32
  }
  func.func @transform_4(%arg0: i32, %arg1: i32, %arg2: i32) -> (i32, i32) {
    %c0_i32 = arith.constant 0 : i32
    %c0_i32_0 = arith.constant 0 : i32
    return %arg0, %c0_i32 : i32, i32
  }
  func.func @transform_5(%arg0: i32, %arg1: i32, %arg2: i32) -> (i32, i32) {
    %c0_i32 = arith.constant 0 : i32
    %c0_i32_0 = arith.constant 0 : i32
    return %arg0, %c0_i32 : i32, i32
  }
  func.func @transform_6(%arg0: i32, %arg1: i32, %arg2: i32) -> (i32, i32) {
    %c0_i32 = arith.constant 0 : i32
    %c0_i32_0 = arith.constant 0 : i32
    return %arg0, %c0_i32 : i32, i32
  }
  func.func @transform_7(%arg0: i32, %arg1: i32, %arg2: i32) -> (i32, i32) {
    %c0_i32 = arith.constant 0 : i32
    %c0_i32_0 = arith.constant 0 : i32
    return %arg0, %c0_i32 : i32, i32
  }
  func.func @transform_8(%arg0: i32, %arg1: i32, %arg2: i32) -> (i32, i32) {
    %c0_i32 = arith.constant 0 : i32
    %c0_i32_0 = arith.constant 0 : i32
    return %arg0, %c0_i32 : i32, i32
  }
}

</mosaic_0001>

<llo_original>
// kernel: batch_norm_2d.3
$region0: #{batch_norm_2d.3}
  #allocation0 [shape = 'u32[]', space=smem, size = 0x4, offset = 0x4, fixed_abs, tag = 'smem constant byte address 0x4 - core index']
  #allocation1 [shape = 'u32[144,128]{1,0:T(1,128)}', space=vmem, size = 0x12000, scoped, tag = 'internal scratch']
  %s0 = inlined_call_operand.vmem [shape: f32[2,4,256], index: 0, kind: input, shape index: {}]
  %s1 = inlined_call_operand.vmem [shape: f32[4,1], index: 1, kind: input, shape index: {}]
  %s2 = inlined_call_operand.vmem [shape: f32[4,1], index: 2, kind: input, shape index: {}]
  %s3 = inlined_call_operand.vmem [shape: f32[2,4,256], index: 3, kind: output, shape index: {}]
  %s4 = sld [smem:[#allocation0]]
  $region22: #{batch_norm_2d.3} parent=0
    _
  %s6 = ssub.s32 1, %s4
  %s7 = scalar_select 0, %s6, %s4
  // Predicated region
  $region2: #{batch_norm_2d.3} parent=0 // pred_check
    _
  $region3: #{batch_norm_2d.3} parent=0 // pred_check_branch
    %9 = sbr.rel (0) target = $region5
  $region4: #{batch_norm_2d.3} parent=0 // pred_region
    _
  $region5: #{batch_norm_2d.3} parent=0 // pred_fallthru
    _
  // Predicated region
  $region6: #{batch_norm_2d.3} parent=0 // pred_check
    _
  $region7: #{batch_norm_2d.3} parent=0 // pred_check_branch
    %11 = sbr.rel (0) target = $region9
  $region8: #{batch_norm_2d.3} parent=0 // pred_region
    _
  $region9: #{batch_norm_2d.3} parent=0 // pred_fallthru
    _
  // Predicated region
  $region10: #{batch_norm_2d.3} parent=0 // pred_check
    _
  $region11: #{batch_norm_2d.3} parent=0 // pred_check_branch
    %13 = sbr.rel (0) target = $region13
  $region12: #{batch_norm_2d.3} parent=0 // pred_region
    _
  $region13: #{batch_norm_2d.3} parent=0 // pred_fallthru
    _
  %v14 = vld [vmem:[%s0] sm:$0xff]
  %v15 = vld [vmem:[%s0 + $0x8] sm:$0xff]
  %v16 = vld [vmem:[%s1] sm:$0xf]
  %18 = vset.pattern.permute.xlu0 0
  %19 = vperm.xlu0 %18, %v16
  %v20 = vpop.permute.xlu0 %19
  %v22 = vunpack.c.l.s4 839922192
  %v23 = vunpack.c.0.s8 %v22
  %v24 = vlaneseq
  %v25 = vshrl.u32 %v24, 7
  %v26 = vsub.s32 %v23, %v25
  %v27 = vrot.slane %v20, %v26
  %v29 = vmul.f32 %v14, %v27
  %v30 = vmul.f32 %v15, %v27
  %v31 = vld [vmem:[%s2] sm:$0xf]
  %33 = vset.pattern.permute.xlu0 0
  %34 = vperm.xlu0 %33, %v31
  %v35 = vpop.permute.xlu0 %34
  %v37 = vunpack.c.l.s4 839922192
  %v38 = vunpack.c.0.s8 %v37
  %v39 = vlaneseq
  %v40 = vshrl.u32 %v39, 7
  %v41 = vsub.s32 %v38, %v40
  %v42 = vrot.slane %v35, %v41
  %v44 = vadd.f32 %v29, %v42
  %v45 = vadd.f32 %v30, %v42
  %46 = vst [vmem:[%s3] sm:$0xff] %v44
  %47 = vst [vmem:[%s3 + $0x8] sm:$0xff] %v45
  // Predicated region
  $region14: #{batch_norm_2d.3} parent=0 // pred_check
    _
  $region15: #{batch_norm_2d.3} parent=0 // pred_check_branch
    %49 = sbr.rel (0) target = $region17
  $region16: #{batch_norm_2d.3} parent=0 // pred_region
    _
  $region17: #{batch_norm_2d.3} parent=0 // pred_fallthru
    _
  // Predicated region
  $region18: #{batch_norm_2d.3} parent=0 // pred_check
    _
  $region19: #{batch_norm_2d.3} parent=0 // pred_check_branch
    %51 = sbr.rel (0) target = $region21
  $region20: #{batch_norm_2d.3} parent=0 // pred_region
    _
  $region21: #{batch_norm_2d.3} parent=0 // pred_fallthru
    _

// kernel: batch_norm_2d.2
$region0: #{batch_norm_2d.2}
  #allocation0 [shape = 'u32[]', space=smem, size = 0x4, offset = 0x4, fixed_abs, tag = 'smem constant byte address 0x4 - core index']
  #allocation1 [shape = 'u32[144,128]{1,0:T(1,128)}', space=vmem, size = 0x12000, scoped, tag = 'internal scratch']
  #allocation2 [shape = 'f32[4,128]{1,0:T(4,128)}', space=vmem, size = 0x800, scoped, tag = 'scratch operand']
  #allocation3 [shape = 'f32[4,128]{1,0:T(4,128)}', space=vmem, size = 0x800, scoped, tag = 'scratch operand']
  #allocation4 [shape = 'f32[4,1]{1,0:T(4,128)}', space=vmem, size = 0x800, scoped, tag = 'scratch operand']
  #allocation5 [shape = 'f32[4,1]{1,0:T(4,128)}', space=vmem, size = 0x800, scoped, tag = 'scratch operand']
  %s0 = inlined_call_operand.vmem [shape: f32[2,4,256], index: 0, kind: input, shape index: {}]
  %s1 = inlined_call_operand.vmem [shape: f32[4,1], index: 1, kind: input, shape index: {}]
  %s2 = inlined_call_operand.vmem [shape: f32[4,1], index: 2, kind: input, shape index: {}]
  %s3 = inlined_call_operand.vmem [shape: f32[4,1], index: 3, kind: input, shape index: {}]
  %s4 = inlined_call_operand.vmem [shape: f32[4,1], index: 4, kind: input, shape index: {}]
  %s5 = inlined_call_operand.vmem [shape: f32[4,1], index: 5, kind: output, shape index: {0}]
  %s6 = inlined_call_operand.vmem [shape: f32[4,1], index: 6, kind: output, shape index: {1}]
  %s7 = inlined_call_operand.vmem [shape: f32[4,1], index: 7, kind: output, shape index: {2}]
  %s8 = inlined_call_operand.vmem [shape: f32[4,1], index: 8, kind: output, shape index: {3}]
  %9 = xla_tuple %s5, %s6, %s7, %s8
  %s10 = sld [smem:[#allocation0]]
  $region62: #{batch_norm_2d.2} parent=0
    _
  %s12 = ssub.s32 1, %s10
  %s13 = scalar_select 0, %s12, %s10
  // Predicated region
  $region2: #{batch_norm_2d.2} parent=0 // pred_check
    _
  $region3: #{batch_norm_2d.2} parent=0 // pred_check_branch
    %15 = sbr.rel (0) target = $region5
  $region4: #{batch_norm_2d.2} parent=0 // pred_region
    _
  $region5: #{batch_norm_2d.2} parent=0 // pred_fallthru
    _
  // Predicated region
  $region6: #{batch_norm_2d.2} parent=0 // pred_check
    _
  $region7: #{batch_norm_2d.2} parent=0 // pred_check_branch
    %17 = sbr.rel (0) target = $region9
  $region8: #{batch_norm_2d.2} parent=0 // pred_region
    _
  $region9: #{batch_norm_2d.2} parent=0 // pred_fallthru
    _
  // Predicated region
  $region10: #{batch_norm_2d.2} parent=0 // pred_check
    _
  $region11: #{batch_norm_2d.2} parent=0 // pred_check_branch
    %19 = sbr.rel (0) target = $region13
  $region12: #{batch_norm_2d.2} parent=0 // pred_region
    _
  $region13: #{batch_norm_2d.2} parent=0 // pred_fallthru
    _
  // Predicated region
  $region14: #{batch_norm_2d.2} parent=0 // pred_check
    _
  $region15: #{batch_norm_2d.2} parent=0 // pred_check_branch
    %21 = sbr.rel (0) target = $region17
  $region16: #{batch_norm_2d.2} parent=0 // pred_region
    _
  $region17: #{batch_norm_2d.2} parent=0 // pred_fallthru
    _
  // Predicated region
  $region18: #{batch_norm_2d.2} parent=0 // pred_check
    _
  $region19: #{batch_norm_2d.2} parent=0 // pred_check_branch
    %23 = sbr.rel (0) target = $region21
  $region20: #{batch_norm_2d.2} parent=0 // pred_region
    _
  $region21: #{batch_norm_2d.2} parent=0 // pred_fallthru
    _
  %p24 = scmp.eq.s32.totalorder 0, 0
  %p25 = scmp.eq.s32.totalorder 0, 0
  %p26 = pnand %p24, %p25
  %p27 = pneg %p26
  // Predicated region
  $region22: #{batch_norm_2d.2} parent=0 // pred_check
    _
  $region23: #{batch_norm_2d.2} parent=0 // pred_check_branch
    %29 = sbr.rel (%p26) target = $region25
  $region24: #{batch_norm_2d.2} parent=0 // pred_region
    %30 = vst [vmem:[#allocation2] sm:$0xf] 0.0
    %31 = vst [vmem:[#allocation3] sm:$0xf] 0.0
    %vm32 = vcmask 3072
    %33 = vst.msk [vmem:[#allocation4] sm:$0xf] %vm32, 0.0
    %34 = vst.msk [vmem:[#allocation5] sm:$0xf] %vm32, 0.0
  $region25: #{batch_norm_2d.2} parent=0 // pred_fallthru
    _
  %v35 = vld [vmem:[#allocation2] sm:$0xf]
  %v36 = vld [vmem:[#allocation3] sm:$0xf]
  %v37 = vld [vmem:[%s0] sm:$0xf]
  %v38 = vadd.f32 %v35, %v37
  %v39 = vmul.f32 %v37, %v37
  %v40 = vadd.f32 %v36, %v39
  %v41 = vld [vmem:[%s0 + $0x4] sm:$0xf]
  %v42 = vadd.f32 %v38, %v41
  %v43 = vmul.f32 %v41, %v41
  %v44 = vadd.f32 %v40, %v43
  %s45 = scalar_lea.vmem %s0, 8
  %v46 = vld [vmem:[%s45] sm:$0xf]
  %v47 = vadd.f32 %v42, %v46
  %v48 = vmul.f32 %v46, %v46
  %v49 = vadd.f32 %v44, %v48
  %v50 = vld [vmem:[%s45 + $0x4] sm:$0xf]
  %v51 = vadd.f32 %v47, %v50
  %v52 = vmul.f32 %v50, %v50
  %v53 = vadd.f32 %v49, %v52
  %54 = vst [vmem:[#allocation2] sm:$0xf] %v51
  %55 = vst [vmem:[#allocation3] sm:$0xf] %v53
  // Predicated region
  $region26: #{batch_norm_2d.2} parent=0 // pred_check
    _
  $region27: #{batch_norm_2d.2} parent=0 // pred_check_branch
    %57 = sbr.rel (%p26) target = $region29
  $region28: #{batch_norm_2d.2} parent=0 // pred_region
    %v58 = vld [vmem:[#allocation2] sm:$0xf]
    %vm59 = vcmask 1043456
    %v60 = vsel %vm59, %v58, 0.0
    %61 = vadd.xlane.f32.xlu0 %v60
    %v62 = vpop.xlane.xlu0 %61
    %v63 = vld [vmem:[#allocation4] sm:$0xf]
    %v64 = vadd.f32 %v63, 0.0
    %v65 = vadd.f32 %v62, %v64
    %v66 = vld [vmem:[#allocation3] sm:$0xf]
    %v67 = vsel %vm59, %v66, 0.0
    %68 = vadd.xlane.f32.xlu0 %v67
    %v69 = vpop.xlane.xlu0 %68
    %v70 = vld [vmem:[#allocation5] sm:$0xf]
    %v71 = vadd.f32 %v70, 0.0
    %v72 = vadd.f32 %v69, %v71
    %v73 = vmul.f32 %v65, 0.001953125
    %v74 = vmul.f32 %v72, 0.001953125
    %v75 = vmul.f32 %v73, %v73
    %v76 = vsub.f32 %v74, %v75
    %v77 = vmax.f32 %v76, 0.0
    %v78 = vadd.f32 %v77, 1e-05
    %v79 = vrsqrt.pop %v78
    %v80 = vld [vmem:[%s1] sm:$0xf]
    %v81 = vmul.f32 %v80, %v79
    %v82 = vld [vmem:[%s2] sm:$0xf]
    %v83 = vmul.f32 %v73, %v81
    %v84 = vsub.f32 %v82, %v83
    %vm85 = vcmask 3072
    %86 = vst.msk [vmem:[%s5] sm:$0xf] %vm85, %v81
    %87 = vst.msk [vmem:[%s6] sm:$0xf] %vm85, %v84
    %v88 = vld [vmem:[%s3] sm:$0xf]
    %v89 = vmul.f32 %v88, 0.9
    %v90 = vmul.f32 %v73, 0.1
    %v91 = vadd.f32 %v89, %v90
    %92 = vst.msk [vmem:[%s7] sm:$0xf] %vm85, %v91
    %v93 = vld [vmem:[%s4] sm:$0xf]
    %v94 = vmul.f32 %v93, 0.9
    %v95 = vmul.f32 %v77, 0.1
    %v96 = vadd.f32 %v94, %v95
    %97 = vst.msk [vmem:[%s8] sm:$0xf] %vm85, %v96
  $region29: #{batch_norm_2d.2} parent=0 // pred_fallthru
    _
  // Predicated region
  $region30: #{batch_norm_2d.2} parent=0 // pred_check
    _
  $region31: #{batch_norm_2d.2} parent=0 // pred_check_branch
    %99 = sbr.rel (0) target = $region33
  $region32: #{batch_norm_2d.2} parent=0 // pred_region
    _
  $region33: #{batch_norm_2d.2} parent=0 // pred_fallthru
    _
  // Predicated region
  $region34: #{batch_norm_2d.2} parent=0 // pred_check
    _
  $region35: #{batch_norm_2d.2} parent=0 // pred_check_branch
    %101 = sbr.rel (0) target = $region37
  $region36: #{batch_norm_2d.2} parent=0 // pred_region
    _
  $region37: #{batch_norm_2d.2} parent=0 // pred_fallthru
    _
  // Predicated region
  $region38: #{batch_norm_2d.2} parent=0 // pred_check
    _
  $region39: #{batch_norm_2d.2} parent=0 // pred_check_branch
    %103 = sbr.rel (0) target = $region41
  $region40: #{batch_norm_2d.2} parent=0 // pred_region
    _
  $region41: #{batch_norm_2d.2} parent=0 // pred_fallthru
    _
  // Predicated region
  $region42: #{batch_norm_2d.2} parent=0 // pred_check
    _
  $region43: #{batch_norm_2d.2} parent=0 // pred_check_branch
    %105 = sbr.rel (0) target = $region45
  $region44: #{batch_norm_2d.2} parent=0 // pred_region
    _
  $region45: #{batch_norm_2d.2} parent=0 // pred_fallthru
    _
  // Predicated region
  $region46: #{batch_norm_2d.2} parent=0 // pred_check
    _
  $region47: #{batch_norm_2d.2} parent=0 // pred_check_branch
    %107 = sbr.rel (0) target = $region49
  $region48: #{batch_norm_2d.2} parent=0 // pred_region
    _
  $region49: #{batch_norm_2d.2} parent=0 // pred_fallthru
    _
  // Predicated region
  $region50: #{batch_norm_2d.2} parent=0 // pred_check
    _
  $region51: #{batch_norm_2d.2} parent=0 // pred_check_branch
    %109 = sbr.rel (0) target = $region53
  $region52: #{batch_norm_2d.2} parent=0 // pred_region
    _
  $region53: #{batch_norm_2d.2} parent=0 // pred_fallthru
    _
  // Predicated region
  $region54: #{batch_norm_2d.2} parent=0 // pred_check
    _
  $region55: #{batch_norm_2d.2} parent=0 // pred_check_branch
    %111 = sbr.rel (0) target = $region57
  $region56: #{batch_norm_2d.2} parent=0 // pred_region
    _
  $region57: #{batch_norm_2d.2} parent=0 // pred_fallthru
    _
  // Predicated region
  $region58: #{batch_norm_2d.2} parent=0 // pred_check
    _
  $region59: #{batch_norm_2d.2} parent=0 // pred_check_branch
    %113 = sbr.rel (0) target = $region61
  $region60: #{batch_norm_2d.2} parent=0 // pred_region
    _
  $region61: #{batch_norm_2d.2} parent=0 // pred_fallthru
    _

</llo_original>
